<compile_context>
chip_gen: v6e
topology: v6e:2x2x1
jax: 0.10.0
libtpu: 0.0.40
codegen_flags: <defaults>
</compile_context>

<pallas_src>
import jax
import jax.numpy as jnp
from jax.experimental import pallas as pl
from jax.experimental.pallas import tpu as pltpu

EPS = 1e-5

B, C_IN, C_OUT, L, K = 2, 4, 8, 16, 2
NL = B * L                      # batch folded into the lane (time) axis
DIL0, DIL1 = 1, 2               # dilations 2**0, 2**1

# ---- packed-parameter layout: one (48, 8) fp32 buffer, one DMA --------------
# Each weight matrix occupies its own 8-sublane band starting at lane 0.
_R_W0T0 = 0            # rows  0: 8, cols 0:C_IN   conv0 tap0 weight (applied to x[t-d])
_R_W0T1 = 8            # rows  8:16, cols 0:C_IN   conv0 tap1 weight (applied to x[t])
_R_W1T0 = 16           # rows 16:24, cols 0:C_OUT  conv1 tap0 weight
_R_W1T1 = 24           # rows 24:32, cols 0:C_OUT  conv1 tap1 weight
_R_WA = 32             # rows 32:40, cols 0:C_IN   1x1 residual adapter weight
_R_VEC = 40            # rows 40:48                per-channel vectors, one per column
_C_CB0, _C_G1, _C_BE1, _C_CBBA, _C_G0, _C_BE0 = 0, 1, 2, 3, 4, 5
NROWS, NCOLS = 48, 8   # NCOLS = max(C_OUT, #scalar columns)


# ----------------------------------------------------------------------------
# Pallas kernel: whole TcBlock forward on lane-dense folded (C, B*L) tiles
# ----------------------------------------------------------------------------
def tc_block_kernel(x_ref,      # (C_IN, B*L)
                    p_ref,      # (NROWS, NCOLS)  all parameters, packed
                    o_ref):     # (C_OUT, B*L)
    x = x_ref[...]
    P = p_ref[...]

    # Sublane-band weight slices (row start multiple of 8, lane 0 -> free views).
    w0t0 = P[_R_W0T0:_R_W0T0 + C_OUT, :C_IN]
    w0t1 = P[_R_W0T1:_R_W0T1 + C_OUT, :C_IN]
    w1t0 = P[_R_W1T0:_R_W1T0 + C_OUT, :C_OUT]
    w1t1 = P[_R_W1T1:_R_W1T1 + C_OUT, :C_OUT]
    wa = P[_R_WA:_R_WA + C_OUT, :C_IN]
    vec = P[_R_VEC:_R_VEC + C_OUT, :]
    cb0 = vec[:, _C_CB0:_C_CB0 + 1]             # conv0 bias
    g1 = vec[:, _C_G1:_C_G1 + 1]                # BN1 gamma
    be1 = vec[:, _C_BE1:_C_BE1 + 1]             # BN1 beta
    cbba = vec[:, _C_CBBA:_C_CBBA + 1]          # conv1 bias + adapter bias (pre-fused)
    g0 = vec[:C_IN, _C_G0:_C_G0 + 1]            # BN0 gamma
    be0 = vec[:C_IN, _C_BE0:_C_BE0 + 1]         # BN0 beta

    # ONE iota; both causal masks hoisted and reused.  t%L < d marks both the
    # causal zero-pad region and the cross-batch wrap of the folded roll.
    t = jax.lax.broadcasted_iota(jnp.int32, (C_OUT, NL), 1) % L
    mask1 = t >= DIL1                           # (C_OUT, NL)  for conv1 (d=2)
    mask0 = t[:C_IN] >= DIL0                    # (C_IN,  NL)  for conv0 (d=1)

    def bn_train(h, gamma, beta):
        # Training-mode BatchNorm1d: per-channel stats over (batch, time) =
        # one lane reduce on the folded axis; biased variance, eps=1e-5.
        mean = jnp.mean(h, axis=1, keepdims=True)
        var = jnp.mean((h - mean) ** 2, axis=1, keepdims=True)
        scale = gamma * jax.lax.rsqrt(var + EPS)
        return h * scale + (beta - mean * scale)

    def shift(h, d, mask):
        # h_sh[:, t] = h[:, t-d] within each batch segment, zeros for t < d.
        return jnp.where(mask, pltpu.roll(h, d, 1), 0.0)

    # --- ResElement 0: BN(4) -> ReLU -> CausalConv(4->8, d=1) ----------------
    # Accumulating dots (no sublane concat, no staging scratch).
    a0 = jnp.maximum(bn_train(x, g0, be0), 0.0)
    y0 = (jnp.dot(w0t0, shift(a0, DIL0, mask0), preferred_element_type=jnp.float32)
          + jnp.dot(w0t1, a0, preferred_element_type=jnp.float32)
          + cb0)

    # --- ResElement 1: BN(8) -> ReLU -> CausalConv(8->8, d=2) ----------------
    # 1x1 residual adapter fused into the same accumulation; ONE fused bias add.
    a1 = jnp.maximum(bn_train(y0, g1, be1), 0.0)
    y1 = (jnp.dot(w1t0, shift(a1, DIL1, mask1), preferred_element_type=jnp.float32)
          + jnp.dot(w1t1, a1, preferred_element_type=jnp.float32)
          + jnp.dot(wa, x, preferred_element_type=jnp.float32)
          + cbba)

    # Single lane-dense store.
    o_ref[...] = y1.astype(o_ref.dtype)


# ----------------------------------------------------------------------------
# Wrapper: parameter packing, folded-layout block call, entry/exit folding
# ----------------------------------------------------------------------------
def pack_params(params):
    (g0, be0, w0, cb0, g1, be1, w1, cb1, wa, ba) = params
    f32 = jnp.float32
    P = jnp.zeros((NROWS, NCOLS), f32)
    P = P.at[_R_W0T0:_R_W0T0 + C_OUT, :C_IN].set(w0[0].astype(f32))
    P = P.at[_R_W0T1:_R_W0T1 + C_OUT, :C_IN].set(w0[1].astype(f32))
    P = P.at[_R_W1T0:_R_W1T0 + C_OUT, :C_OUT].set(w1[0].astype(f32))
    P = P.at[_R_W1T1:_R_W1T1 + C_OUT, :C_OUT].set(w1[1].astype(f32))
    P = P.at[_R_WA:_R_WA + C_OUT, :C_IN].set(wa.astype(f32))
    vec = jnp.zeros((C_OUT, NCOLS), f32)
    vec = vec.at[:, _C_CB0:_C_CB0 + 1].set(cb0.astype(f32))
    vec = vec.at[:, _C_G1:_C_G1 + 1].set(g1.astype(f32))
    vec = vec.at[:, _C_BE1:_C_BE1 + 1].set(be1.astype(f32))
    vec = vec.at[:, _C_CBBA:_C_CBBA + 1].set((cb1 + ba).astype(f32))  # fused bias
    vec = vec.at[:C_IN, _C_G0:_C_G0 + 1].set(g0.astype(f32))
    vec = vec.at[:C_IN, _C_BE0:_C_BE0 + 1].set(be0.astype(f32))
    P = P.at[_R_VEC:_R_VEC + C_OUT, :].set(vec)
    return P


def fold_time_batch(x):
    # (B, C, L) -> (C, B*L): paid ONCE at model entry when chaining blocks.
    b, c, length = x.shape
    return jnp.transpose(x, (1, 0, 2)).reshape(c, b * length)


def unfold_time_batch(x_flat, b, length):
    # (C, B*L) -> (B, C, L): paid ONCE at model exit.
    c = x_flat.shape[0]
    return jnp.transpose(x_flat.reshape(c, b, length), (1, 0, 2))


def tc_block_folded(x_flat, packed):
    """One TcBlock on folded (C, B*L) activations. Chain these directly."""
    vmem = pl.BlockSpec(memory_space=pltpu.MemorySpace.VMEM)
    return pl.pallas_call(
        tc_block_kernel,
        out_shape=jax.ShapeDtypeStruct((C_OUT, NL), jnp.float32),
        in_specs=[vmem, vmem],
        out_specs=vmem,
    )(x_flat, packed)


def tc_block_pallas(x, params):
    b, c_in, length = x.shape
    assert (b, c_in, length) == (B, C_IN, L), (b, c_in, length)
    out_flat = tc_block_folded(fold_time_batch(x), pack_params(params))
    return unfold_time_batch(out_flat, B, L)             # (B, C_OUT, L)


# ----------------------------------------------------------------------------
# Pure-JAX reference (lax.conv_general_dilated) for correctness checking
# ----------------------------------------------------------------------------
def _bn_ref(x, gamma, beta):
    mean = jnp.mean(x, axis=(0, 2), keepdims=True)
    var = jnp.mean((x - mean) ** 2, axis=(0, 2), keepdims=True)
    return (x - mean) / jnp.sqrt(var + EPS) * gamma[None] + beta[None]


def _causal_conv_ref(x, w_koi, bias, dilation):
    k = w_koi.shape[0]
    w_oik = jnp.transpose(w_koi, (1, 2, 0))            # (O, I, K) like PyTorch
    pad = (k - 1) * dilation
    y = jax.lax.conv_general_dilated(
        x, w_oik, window_strides=(1,), padding=[(pad, pad)],
        rhs_dilation=(dilation,), dimension_numbers=("NCH", "OIH", "NCH"))
    y = y[..., : x.shape[-1]]                          # trim trailing pad (causal)
    return y + bias[None]


def tc_block_ref(x, params):
    (g0, be0, w0, cb0, g1, be1, w1, cb1, wa, ba) = params
    a0 = jax.nn.relu(_bn_ref(x, g0, be0))
    y0 = _causal_conv_ref(a0, w0, cb0, DIL0)
    a1 = jax.nn.relu(_bn_ref(y0, g1, be1))
    y1 = _causal_conv_ref(a1, w1, cb1, DIL1)
    adapt = jnp.einsum("oi,bil->bol", wa, x) + ba[None]
    return y1 + adapt


# ----------------------------------------------------------------------------
def make_params(key):
    ks = jax.random.split(key, 10)
    f = jnp.float32
    g0 = 1.0 + 0.1 * jax.random.normal(ks[0], (C_IN, 1), f)
    be0 = 0.1 * jax.random.normal(ks[1], (C_IN, 1), f)
    w0 = 0.3 * jax.random.normal(ks[2], (K, C_OUT, C_IN), f)
    cb0 = 0.1 * jax.random.normal(ks[3], (C_OUT, 1), f)
    g1 = 1.0 + 0.1 * jax.random.normal(ks[4], (C_OUT, 1), f)
    be1 = 0.1 * jax.random.normal(ks[5], (C_OUT, 1), f)
    w1 = 0.3 * jax.random.normal(ks[6], (K, C_OUT, C_OUT), f)
    cb1 = 0.1 * jax.random.normal(ks[7], (C_OUT, 1), f)
    wa = 0.3 * jax.random.normal(ks[8], (C_OUT, C_IN), f)
    ba = 0.1 * jax.random.normal(ks[9], (C_OUT, 1), f)
    return (g0, be0, w0, cb0, g1, be1, w1, cb1, wa, ba)


if __name__ == "__main__":
    key = jax.random.PRNGKey(0)
    kx, kp = jax.random.split(key)
    x = jax.random.normal(kx, (B, C_IN, L), jnp.float32)   # NCL, like PyTorch
    params = make_params(kp)

    out = tc_block_pallas(x, params)
    jax.block_until_ready(out)

    ref = tc_block_ref(x, params)
    assert out.shape == (B, C_OUT, L), out.shape
    assert jnp.allclose(out, ref, atol=1e-4, rtol=1e-4), \
        float(jnp.max(jnp.abs(out - ref)))
    # TODO(synk): Dropout1d(p=0.0) is an exact identity and is therefore omitted.
    print("KERNEL_OK")
</pallas_src>

<mosaic_0001>
module attributes {stable_mosaic.version = 11 : i64} {
  func.func @tc_block_kernel(%arg0: memref<4x32xf32, #tpu.memory_space<vmem>>, %arg1: memref<48x8xf32, #tpu.memory_space<vmem>>, %arg2: memref<8x32xf32, #tpu.memory_space<vmem>>) attributes {dimension_semantics = [], scalar_prefetch = 0 : i64, scratch_operands = 0 : i64, tpu.core_type = #tpu.core_type<tc>} {
    %c0 = arith.constant 0 : index
    %c0_0 = arith.constant 0 : index
    %0 = vector.load %arg0[%c0, %c0_0] : memref<4x32xf32, #tpu.memory_space<vmem>>, vector<4x32xf32>
    %c0_1 = arith.constant 0 : index
    %c0_2 = arith.constant 0 : index
    %1 = vector.load %arg1[%c0_1, %c0_2] : memref<48x8xf32, #tpu.memory_space<vmem>>, vector<48x8xf32>
    %2 = vector.extract_strided_slice %1 {offsets = [0, 0], sizes = [8, 4], strides = [1, 1]} : vector<48x8xf32> to vector<8x4xf32>
    %3 = vector.extract_strided_slice %1 {offsets = [8, 0], sizes = [8, 4], strides = [1, 1]} : vector<48x8xf32> to vector<8x4xf32>
    %4 = vector.extract_strided_slice %1 {offsets = [16, 0], sizes = [8, 8], strides = [1, 1]} : vector<48x8xf32> to vector<8x8xf32>
    %5 = vector.extract_strided_slice %1 {offsets = [24, 0], sizes = [8, 8], strides = [1, 1]} : vector<48x8xf32> to vector<8x8xf32>
    %6 = vector.extract_strided_slice %1 {offsets = [32, 0], sizes = [8, 4], strides = [1, 1]} : vector<48x8xf32> to vector<8x4xf32>
    %7 = vector.extract_strided_slice %1 {offsets = [40, 0], sizes = [8, 8], strides = [1, 1]} : vector<48x8xf32> to vector<8x8xf32>
    %8 = vector.extract_strided_slice %7 {offsets = [0, 0], sizes = [8, 1], strides = [1, 1]} : vector<8x8xf32> to vector<8x1xf32>
    %9 = vector.extract_strided_slice %7 {offsets = [0, 1], sizes = [8, 1], strides = [1, 1]} : vector<8x8xf32> to vector<8x1xf32>
    %10 = vector.extract_strided_slice %7 {offsets = [0, 2], sizes = [8, 1], strides = [1, 1]} : vector<8x8xf32> to vector<8x1xf32>
    %11 = vector.extract_strided_slice %7 {offsets = [0, 3], sizes = [8, 1], strides = [1, 1]} : vector<8x8xf32> to vector<8x1xf32>
    %12 = vector.extract_strided_slice %7 {offsets = [0, 4], sizes = [4, 1], strides = [1, 1]} : vector<8x8xf32> to vector<4x1xf32>
    %13 = vector.extract_strided_slice %7 {offsets = [0, 5], sizes = [4, 1], strides = [1, 1]} : vector<8x8xf32> to vector<4x1xf32>
    %14 = tpu.iota {dimensions = array<i32: 1>} : vector<8x32xi32>
    %c16_i32 = arith.constant 16 : i32
    %c0_i32 = arith.constant 0 : i32
    %15 = arith.cmpi eq, %c16_i32, %c0_i32 : i32
    %c1_i32 = arith.constant 1 : i32
    %16 = arith.select %15, %c1_i32, %c16_i32 : i32
    %17 = vector.broadcast %16 : i32 to vector<8x32xi32>
    %18 = arith.remsi %14, %17 : vector<8x32xi32>
    %c0_i32_3 = arith.constant 0 : i32
    %19 = vector.broadcast %c0_i32_3 : i32 to vector<8x32xi32>
    %20 = arith.cmpi ne, %18, %19 : vector<8x32xi32>
    %c0_i32_4 = arith.constant 0 : i32
    %21 = vector.broadcast %c0_i32_4 : i32 to vector<8x32xi32>
    %22 = arith.cmpi slt, %18, %21 : vector<8x32xi32>
    %c0_i32_5 = arith.constant 0 : i32
    %23 = arith.cmpi slt, %16, %c0_i32_5 : i32
    %24 = vector.broadcast %23 : i1 to vector<8x32xi1>
    %25 = vector.broadcast %24 : vector<8x32xi1> to vector<8x32xi1>
    %26 = arith.xori %22, %25 : vector<8x32xi1>
    %27 = arith.andi %26, %20 : vector<8x32xi1>
    %28 = vector.broadcast %16 : i32 to vector<8x32xi32>
    %29 = arith.addi %18, %28 : vector<8x32xi32>
    %30 = arith.select %27, %29, %18 : vector<8x32xi1>, vector<8x32xi32>
    %c2_i32 = arith.constant 2 : i32
    %31 = vector.broadcast %c2_i32 : i32 to vector<8x32xi32>
    %32 = arith.cmpi sge, %30, %31 : vector<8x32xi32>
    %33 = vector.extract_strided_slice %30 {offsets = [0, 0], sizes = [4, 32], strides = [1, 1]} : vector<8x32xi32> to vector<4x32xi32>
    %c1_i32_6 = arith.constant 1 : i32
    %34 = vector.broadcast %c1_i32_6 : i32 to vector<4x32xi32>
    %35 = arith.cmpi sge, %33, %34 : vector<4x32xi32>
    %cst = arith.constant dense<0.000000e+00> : vector<4xf32>
    %36 = vector.multi_reduction <add>, %0, %cst [1] : vector<4x32xf32> to vector<4xf32>
    %37 = vector.shape_cast %36 : vector<4xf32> to vector<4x1xf32>
    %cst_7 = arith.constant 3.200000e+01 : f32
    %38 = vector.broadcast %cst_7 : f32 to vector<4x1xf32>
    %39 = arith.divf %37, %38 : vector<4x1xf32>
    %40 = vector.broadcast %39 : vector<4x1xf32> to vector<4x32xf32>
    %41 = arith.subf %0, %40 : vector<4x32xf32>
    %42 = arith.mulf %41, %41 : vector<4x32xf32>
    %cst_8 = arith.constant dense<0.000000e+00> : vector<4xf32>
    %43 = vector.multi_reduction <add>, %42, %cst_8 [1] : vector<4x32xf32> to vector<4xf32>
    %44 = vector.shape_cast %43 : vector<4xf32> to vector<4x1xf32>
    %cst_9 = arith.constant 3.200000e+01 : f32
    %45 = vector.broadcast %cst_9 : f32 to vector<4x1xf32>
    %46 = arith.divf %44, %45 : vector<4x1xf32>
    %cst_10 = arith.constant 9.99999974E-6 : f32
    %47 = vector.broadcast %cst_10 : f32 to vector<4x1xf32>
    %48 = arith.addf %46, %47 : vector<4x1xf32>
    %49 = math.rsqrt %48 : vector<4x1xf32>
    %50 = arith.mulf %12, %49 : vector<4x1xf32>
    %51 = vector.broadcast %50 : vector<4x1xf32> to vector<4x32xf32>
    %52 = arith.mulf %0, %51 : vector<4x32xf32>
    %53 = arith.mulf %39, %50 : vector<4x1xf32>
    %54 = arith.subf %13, %53 : vector<4x1xf32>
    %55 = vector.broadcast %54 : vector<4x1xf32> to vector<4x32xf32>
    %56 = arith.addf %52, %55 : vector<4x32xf32>
    %cst_11 = arith.constant 0.000000e+00 : f32
    %57 = vector.broadcast %cst_11 : f32 to vector<4x32xf32>
    %58 = arith.maximumf %56, %57 : vector<4x32xf32>
    %c1_i32_12 = arith.constant 1 : i32
    %59 = tpu.dynamic_rotate %58 by %c1_i32_12 dim 1 : vector<4x32xf32>, i32 -> vector<4x32xf32>
    %cst_13 = arith.constant 0.000000e+00 : f32
    %60 = vector.broadcast %cst_13 : f32 to vector<4x32xf32>
    %61 = arith.select %35, %59, %60 : vector<4x32xi1>, vector<4x32xf32>
    %cst_14 = arith.constant dense<0.000000e+00> : vector<8x32xf32>
    %62 = tpu.matmul %2, %61, %cst_14 {dimension_numbers = #tpu.dot_dimension_numbers<[1], [0], [0], [1], [0, 0, 1, 1], [], []>} : vector<8x4xf32>, vector<4x32xf32>, vector<8x32xf32> -> vector<8x32xf32>
    %cst_15 = arith.constant dense<0.000000e+00> : vector<8x32xf32>
    %63 = tpu.matmul %3, %58, %cst_15 {dimension_numbers = #tpu.dot_dimension_numbers<[1], [0], [0], [1], [0, 0, 1, 1], [], []>} : vector<8x4xf32>, vector<4x32xf32>, vector<8x32xf32> -> vector<8x32xf32>
    %64 = arith.addf %62, %63 : vector<8x32xf32>
    %65 = vector.broadcast %8 : vector<8x1xf32> to vector<8x32xf32>
    %66 = arith.addf %64, %65 : vector<8x32xf32>
    %cst_16 = arith.constant dense<0.000000e+00> : vector<8xf32>
    %67 = vector.multi_reduction <add>, %66, %cst_16 [1] : vector<8x32xf32> to vector<8xf32>
    %68 = vector.shape_cast %67 : vector<8xf32> to vector<8x1xf32>
    %cst_17 = arith.constant 3.200000e+01 : f32
    %69 = vector.broadcast %cst_17 : f32 to vector<8x1xf32>
    %70 = arith.divf %68, %69 : vector<8x1xf32>
    %71 = vector.broadcast %70 : vector<8x1xf32> to vector<8x32xf32>
    %72 = arith.subf %66, %71 : vector<8x32xf32>
    %73 = arith.mulf %72, %72 : vector<8x32xf32>
    %cst_18 = arith.constant dense<0.000000e+00> : vector<8xf32>
    %74 = vector.multi_reduction <add>, %73, %cst_18 [1] : vector<8x32xf32> to vector<8xf32>
    %75 = vector.shape_cast %74 : vector<8xf32> to vector<8x1xf32>
    %cst_19 = arith.constant 3.200000e+01 : f32
    %76 = vector.broadcast %cst_19 : f32 to vector<8x1xf32>
    %77 = arith.divf %75, %76 : vector<8x1xf32>
    %cst_20 = arith.constant 9.99999974E-6 : f32
    %78 = vector.broadcast %cst_20 : f32 to vector<8x1xf32>
    %79 = arith.addf %77, %78 : vector<8x1xf32>
    %80 = math.rsqrt %79 : vector<8x1xf32>
    %81 = arith.mulf %9, %80 : vector<8x1xf32>
    %82 = vector.broadcast %81 : vector<8x1xf32> to vector<8x32xf32>
    %83 = arith.mulf %66, %82 : vector<8x32xf32>
    %84 = arith.mulf %70, %81 : vector<8x1xf32>
    %85 = arith.subf %10, %84 : vector<8x1xf32>
    %86 = vector.broadcast %85 : vector<8x1xf32> to vector<8x32xf32>
    %87 = arith.addf %83, %86 : vector<8x32xf32>
    %cst_21 = arith.constant 0.000000e+00 : f32
    %88 = vector.broadcast %cst_21 : f32 to vector<8x32xf32>
    %89 = arith.maximumf %87, %88 : vector<8x32xf32>
    %c2_i32_22 = arith.constant 2 : i32
    %90 = tpu.dynamic_rotate %89 by %c2_i32_22 dim 1 : vector<8x32xf32>, i32 -> vector<8x32xf32>
    %cst_23 = arith.constant 0.000000e+00 : f32
    %91 = vector.broadcast %cst_23 : f32 to vector<8x32xf32>
    %92 = arith.select %32, %90, %91 : vector<8x32xi1>, vector<8x32xf32>
    %cst_24 = arith.constant dense<0.000000e+00> : vector<8x32xf32>
    %93 = tpu.matmul %4, %92, %cst_24 {dimension_numbers = #tpu.dot_dimension_numbers<[1], [0], [0], [1], [0, 0, 1, 1], [], []>} : vector<8x8xf32>, vector<8x32xf32>, vector<8x32xf32> -> vector<8x32xf32>
    %cst_25 = arith.constant dense<0.000000e+00> : vector<8x32xf32>
    %94 = tpu.matmul %5, %89, %cst_25 {dimension_numbers = #tpu.dot_dimension_numbers<[1], [0], [0], [1], [0, 0, 1, 1], [], []>} : vector<8x8xf32>, vector<8x32xf32>, vector<8x32xf32> -> vector<8x32xf32>
    %95 = arith.addf %93, %94 : vector<8x32xf32>
    %cst_26 = arith.constant dense<0.000000e+00> : vector<8x32xf32>
    %96 = tpu.matmul %6, %0, %cst_26 {dimension_numbers = #tpu.dot_dimension_numbers<[1], [0], [0], [1], [0, 0, 1, 1], [], []>} : vector<8x4xf32>, vector<4x32xf32>, vector<8x32xf32> -> vector<8x32xf32>
    %97 = arith.addf %95, %96 : vector<8x32xf32>
    %98 = vector.broadcast %11 : vector<8x1xf32> to vector<8x32xf32>
    %99 = arith.addf %97, %98 : vector<8x32xf32>
    %c0_27 = arith.constant 0 : index
    %c0_28 = arith.constant 0 : index
    %100 = vector.load %arg2[%c0_27, %c0_28] : memref<8x32xf32, #tpu.memory_space<vmem>>, vector<8x32xf32>
    tpu.vector_store %arg2[%c0_27, %c0_28], %99 {strides = array<i32>} : memref<8x32xf32, #tpu.memory_space<vmem>>, vector<8x32xf32>,
    return
  }
}

</mosaic_0001>

<llo_original>
// kernel: tpu_custom_call.1
$region0: #{tpu_custom_call.1}
  #allocation0 [shape = 'u32[]', space=smem, size = 0x4, offset = 0x4, fixed_abs, tag = 'smem constant byte address 0x4 - core index']
  #allocation1 [shape = 'u32[144,128]{1,0:T(1,128)}', space=vmem, size = 0x12000, scoped, tag = 'internal scratch']
  %s0 = inlined_call_operand.vmem [shape: f32[4,32], index: 0, kind: input, shape index: {}]
  %s1 = inlined_call_operand.vmem [shape: f32[48,8], index: 1, kind: input, shape index: {}]
  %s2 = inlined_call_operand.hbm [shape: f32[8,32], index: 2, kind: output, shape index: {}]
  %s3 = sld [smem:[#allocation0]]
  $region18: #{tpu_custom_call.1} parent=0
    _
  %s5 = ssub.s32 1, %s3
  %s6 = scalar_select 0, %s5, %s3
  $region1: #{tpu_custom_call.1} parent=0
    #allocation2 [shape = 'u8[4096]{0}', space=vmem, size = 0x1000, scoped, tag = 'output window, operand 0, single buffered']
    #allocation3 [shape = 's32[1]{0}', space=sflag, size = 0x4, scoped, tag = 'scoped memory for tpu_custom_call.1']
    %7 = vsyncpa [#allocation3], 0
    // Predicated region
    $region2: #{tpu_custom_call.1} parent=1 // pred_check
      _
    $region3: #{tpu_custom_call.1} parent=1 // pred_check_branch
      %9 = sbr.rel (0) target = $region5
    $region4: #{tpu_custom_call.1} parent=1 // pred_region
      _
    $region5: #{tpu_custom_call.1} parent=1 // pred_fallthru
      _
    // Predicated region
    $region6: #{tpu_custom_call.1} parent=1 // pred_check
      _
    $region7: #{tpu_custom_call.1} parent=1 // pred_check_branch
      %11 = sbr.rel (0) target = $region9
    $region8: #{tpu_custom_call.1} parent=1 // pred_region
      _
    $region9: #{tpu_custom_call.1} parent=1 // pred_fallthru
      _
    %v12 = vld [vmem:[%s0] sm:$0xf]
    %v13 = vld [vmem:[%s1] sm:$0xff]
    %v14 = vld [vmem:[%s1 + $0x8] sm:$0xff]
    %v15 = vld [vmem:[%s1 + $0x10] sm:$0xff]
    %v16 = vld [vmem:[%s1 + $0x18] sm:$0xff]
    %v17 = vld [vmem:[%s1 + $0x20] sm:$0xff]
    %v18 = vld [vmem:[%s1 + $0x28] sm:$0xff]
    %v19 = vlaneseq
    %v20 = vand.u32 %v19, 127
    %vm21 = vcmp.lt.s32.totalorder %v20, 0
    %v22 = vsub.s32 0, %v20
    %v23 = vsel %vm21, %v22, %v20
    %v24 = vshrl.u32 %v23, 4
    %v25 = vand.u32 %v23, 15
    %v26 = vsub.s32 0, %v25
    %v27 = vsel %vm21, %v26, %v25
    %vm28 = vcmp.ne.s32.totalorder %v27, 0
    %vm29 = vcmp.lt.s32.totalorder %v27, 0
    %vm30 = vmand %vm29, %vm28
    %v31 = vadd.s32 %v27, 16
    %v32 = vsel %vm30, %v31, %v27
    %vm33 = vcmp.ge.s32.totalorder %v32, 2
    %vm34 = vcmp.ge.s32.totalorder %v32, 1
    %vm35 = vcmask 257024
    %v36 = vsel %vm35, %v12, 0.0
    %37 = vadd.xlane.f32.xlu0 %v36
    %v38 = vpop.xlane.xlu0 %37
    %v39 = vrcp.pop 32.0
    %v40 = vmul.f32 %v38, %v39
    %v41 = vsub.f32 %v12, %v40
    %v42 = vmul.f32 %v41, %v41
    %v43 = vsel %vm35, %v42, 0.0
    %44 = vadd.xlane.f32.xlu0 %v43
    %v45 = vpop.xlane.xlu0 %44
    %v46 = vmul.f32 %v45, %v39
    %v47 = vadd.f32 %v46, 1e-05
    %v48 = vrsqrt.pop %v47
    %v49 = vmul.f32 %v18, %v48
    %51 = vset.pattern.permute.xlu0 4
    %52 = vperm.xlu0 %51, %v49
    %v53 = vpop.permute.xlu0 %52
    %v55 = vmul.f32 %v12, %v53
    %v56 = vmul.f32 %v40, %v49
    %58 = vrot.lane.b32.xlu0 %v56, 1
    %v59 = vpop.permute.xlu0 %58
    %v61 = vsub.f32 %v18, %v59
    %63 = vset.pattern.permute.xlu0 5
    %64 = vperm.xlu0 %63, %v61
    %v65 = vpop.permute.xlu0 %64
    %v67 = vadd.f32 %v55, %v65
    %v68 = vmax.f32 %v67, 0.0
    %vm69 = vcmask 1047808
    %70 = vrot.lane.b32.xlu0 %v68, 32
    %v71 = vpop.permute.xlu0 %70
    %v72 = vsel %vm69, %v71, %v68
    %73 = vrot.lane.b32.xlu0 %v72, 32
    %v74 = vpop.permute.xlu0 %73
    %v75 = vsel %vm69, %v74, %v68
    %77 = vrot.lane.b32.xlu0 %v75, 97
    %v78 = vpop.permute.xlu0 %77
    %v80 = vsel %vm34, %v78, 0.0
    %vm81 = vcmask 31744
    %v83 = vsel %vm81, %v14, 0
    %vm85 = vcmask 1043456
    %v87 = vsel %vm85, %v68, 0
    %89 = vmatprep.subr.mxu0 0.0
    %90 = vmatpush1.msra.mxu0 0.0
    %91 = vmatprep.subr.mxu0 0.0
    %92 = vmatpush1.msra.mxu0 0.0
    %93 = vmatprep.subr.mxu0 0.0
    %94 = vmatpush1.msra.mxu0 0.0
    %95 = vmatprep.subr.mxu0 0.0
    %96 = vmatpush1.msra.mxu0 0.0
    %97 = vmatprep.subr.mxu0 0.0
    %98 = vmatpush1.msra.mxu0 0.0
    %99 = vmatprep.subr.mxu0 0.0
    %100 = vmatpush1.msra.mxu0 0.0
    %101 = vmatprep.subr.mxu0 0.0
    %102 = vmatpush1.msra.mxu0 0.0
    %103 = vmatprep.subr.mxu0 0.0
    %104 = vmatpush1.msra.mxu0 0.0
    %105 = vmatprep.subr.mxu0 0.0
    %106 = vmatpush1.msra.mxu0 0.0
    %107 = vmatprep.subr.mxu0 0.0
    %108 = vmatpush1.msra.mxu0 0.0
    %109 = vmatprep.subr.mxu0 0.0
    %110 = vmatpush1.msra.mxu0 0.0
    %111 = vmatprep.subr.mxu0 0.0
    %112 = vmatpush1.msra.mxu0 0.0
    %113 = vmatprep.subr.mxu0 0.0
    %114 = vmatpush1.msra.mxu0 0.0
    %115 = vmatprep.subr.mxu0 0.0
    %116 = vmatpush1.msra.mxu0 0.0
    %117 = vmatprep.subr.mxu0 0.0
    %118 = vmatpush1.msra.mxu0 0.0
    %119 = vmatprep.subr.mxu0 0.0
    %120 = vmatpush1.msra.mxu0 %v87
    %121 = vmatprep.subr.mxu0 0.0
    %122 = vmatpush2.msra.mxu0 0.0
    %123 = vmatprep.subr.mxu0 0.0
    %124 = vmatpush2.msra.mxu0 0.0
    %125 = vmatprep.subr.mxu0 0.0
    %126 = vmatpush2.msra.mxu0 0.0
    %127 = vmatprep.subr.mxu0 0.0
    %128 = vmatpush2.msra.mxu0 0.0
    %129 = vmatprep.subr.mxu0 0.0
    %130 = vmatpush2.msra.mxu0 0.0
    %131 = vmatprep.subr.mxu0 0.0
    %132 = vmatpush2.msra.mxu0 0.0
    %133 = vmatprep.subr.mxu0 0.0
    %134 = vmatpush2.msra.mxu0 0.0
    %135 = vmatprep.subr.mxu0 0.0
    %136 = vmatpush2.msra.mxu0 0.0
    %137 = vmatprep.subr.mxu0 0.0
    %138 = vmatpush2.msra.mxu0 0.0
    %139 = vmatprep.subr.mxu0 0.0
    %140 = vmatpush2.msra.mxu0 0.0
    %141 = vmatprep.subr.mxu0 0.0
    %142 = vmatpush2.msra.mxu0 0.0
    %143 = vmatprep.subr.mxu0 0.0
    %144 = vmatpush2.msra.mxu0 0.0
    %145 = vmatprep.subr.mxu0 0.0
    %146 = vmatpush2.msra.mxu0 0.0
    %147 = vmatprep.subr.mxu0 0.0
    %148 = vmatpush2.msra.mxu0 0.0
    %149 = vmatprep.subr.mxu0 0.0
    %150 = vmatpush2.msra.mxu0 0.0
    %151 = vmatprep.subr.mxu0 0.0
    %152 = vmatpush2.msra.mxu0 0.0
    %153 = vmatprep.mubr.f32.mxu0 0.0
    %154 = vmatmul.mubr.f32.gmra.mxu0 %v83
    %v155 = vpop.f32.mrf.mxu0
    %v156 = vadd.f32 0.0, %v155
    %v157 = vpop.f32.mrf.mxu0
    %158 = vdwg.mxu0
    %v160 = vsel %vm81, %v13, 0
    %v163 = vsel %vm85, %v80, 0
    %165 = vmatprep.subr.mxu0 0.0
    %166 = vmatpush1.msra.mxu0 0.0
    %167 = vmatprep.subr.mxu0 0.0
    %168 = vmatpush1.msra.mxu0 0.0
    %169 = vmatprep.subr.mxu0 0.0
    %170 = vmatpush1.msra.mxu0 0.0
    %171 = vmatprep.subr.mxu0 0.0
    %172 = vmatpush1.msra.mxu0 0.0
    %173 = vmatprep.subr.mxu0 0.0
    %174 = vmatpush1.msra.mxu0 0.0
    %175 = vmatprep.subr.mxu0 0.0
    %176 = vmatpush1.msra.mxu0 0.0
    %177 = vmatprep.subr.mxu0 0.0
    %178 = vmatpush1.msra.mxu0 0.0
    %179 = vmatprep.subr.mxu0 0.0
    %180 = vmatpush1.msra.mxu0 0.0
    %181 = vmatprep.subr.mxu0 0.0
    %182 = vmatpush1.msra.mxu0 0.0
    %183 = vmatprep.subr.mxu0 0.0
    %184 = vmatpush1.msra.mxu0 0.0
    %185 = vmatprep.subr.mxu0 0.0
    %186 = vmatpush1.msra.mxu0 0.0
    %187 = vmatprep.subr.mxu0 0.0
    %188 = vmatpush1.msra.mxu0 0.0
    %189 = vmatprep.subr.mxu0 0.0
    %190 = vmatpush1.msra.mxu0 0.0
    %191 = vmatprep.subr.mxu0 0.0
    %192 = vmatpush1.msra.mxu0 0.0
    %193 = vmatprep.subr.mxu0 0.0
    %194 = vmatpush1.msra.mxu0 0.0
    %195 = vmatprep.subr.mxu0 0.0
    %196 = vmatpush1.msra.mxu0 %v163
    %197 = vmatprep.subr.mxu0 0.0
    %198 = vmatpush2.msra.mxu0 0.0
    %199 = vmatprep.subr.mxu0 0.0
    %200 = vmatpush2.msra.mxu0 0.0
    %201 = vmatprep.subr.mxu0 0.0
    %202 = vmatpush2.msra.mxu0 0.0
    %203 = vmatprep.subr.mxu0 0.0
    %204 = vmatpush2.msra.mxu0 0.0
    %205 = vmatprep.subr.mxu0 0.0
    %206 = vmatpush2.msra.mxu0 0.0
    %207 = vmatprep.subr.mxu0 0.0
    %208 = vmatpush2.msra.mxu0 0.0
    %209 = vmatprep.subr.mxu0 0.0
    %210 = vmatpush2.msra.mxu0 0.0
    %211 = vmatprep.subr.mxu0 0.0
    %212 = vmatpush2.msra.mxu0 0.0
    %213 = vmatprep.subr.mxu0 0.0
    %214 = vmatpush2.msra.mxu0 0.0
    %215 = vmatprep.subr.mxu0 0.0
    %216 = vmatpush2.msra.mxu0 0.0
    %217 = vmatprep.subr.mxu0 0.0
    %218 = vmatpush2.msra.mxu0 0.0
    %219 = vmatprep.subr.mxu0 0.0
    %220 = vmatpush2.msra.mxu0 0.0
    %221 = vmatprep.subr.mxu0 0.0
    %222 = vmatpush2.msra.mxu0 0.0
    %223 = vmatprep.subr.mxu0 0.0
    %224 = vmatpush2.msra.mxu0 0.0
    %225 = vmatprep.subr.mxu0 0.0
    %226 = vmatpush2.msra.mxu0 0.0
    %227 = vmatprep.subr.mxu0 0.0
    %228 = vmatpush2.msra.mxu0 0.0
    %229 = vmatprep.mubr.f32.mxu0 0.0
    %230 = vmatmul.mubr.f32.gmra.mxu0 %v160
    %v231 = vpop.f32.mrf.mxu0
    %v232 = vadd.f32 %v156, %v231
    %v233 = vpop.f32.mrf.mxu0
    %234 = vdwg.mxu0
    %236 = vset.pattern.permute.xlu0 0
    %237 = vperm.xlu0 %236, %v18
    %v238 = vpop.permute.xlu0 %237
    %v240 = vadd.f32 %v232, %v238
    %vm241 = vcmask 261120
    %v242 = vsel %vm241, %v240, 0.0
    %243 = vadd.xlane.f32.xlu0 %v242
    %v244 = vpop.xlane.xlu0 %243
    %v245 = vmul.f32 %v244, %v39
    %v246 = vsub.f32 %v240, %v245
    %v247 = vmul.f32 %v246, %v246
    %v248 = vsel %vm241, %v247, 0.0
    %249 = vadd.xlane.f32.xlu0 %v248
    %v250 = vpop.xlane.xlu0 %249
    %v251 = vmul.f32 %v250, %v39
    %v252 = vadd.f32 %v251, 1e-05
    %v253 = vrsqrt.pop %v252
    %v254 = vmul.f32 %v18, %v253
    %256 = vset.pattern.permute.xlu0 1
    %257 = vperm.xlu0 %256, %v254
    %v258 = vpop.permute.xlu0 %257
    %v260 = vmul.f32 %v240, %v258
    %v261 = vmul.f32 %v245, %v254
    %263 = vrot.lane.b32.xlu0 %v261, 1
    %v264 = vpop.permute.xlu0 %263
    %v266 = vsub.f32 %v18, %v264
    %268 = vset.pattern.permute.xlu0 2
    %269 = vperm.xlu0 %268, %v266
    %v270 = vpop.permute.xlu0 %269
    %v272 = vadd.f32 %v260, %v270
    %v273 = vmax.f32 %v272, 0.0
    %274 = vrot.lane.b32.xlu0 %v273, 32
    %v275 = vpop.permute.xlu0 %274
    %v276 = vsel %vm69, %v275, %v273
    %277 = vrot.lane.b32.xlu0 %v276, 32
    %v278 = vpop.permute.xlu0 %277
    %v279 = vsel %vm69, %v278, %v273
    %281 = vrot.lane.b32.xlu0 %v279, 98
    %v282 = vpop.permute.xlu0 %281
    %v284 = vsel %vm33, %v282, 0.0
    %vm285 = vcmask 64512
    %v287 = vsel %vm285, %v16, 0
    %289 = vmatprep.subr.mxu0 0.0
    %290 = vmatpush1.msra.mxu0 0.0
    %291 = vmatprep.subr.mxu0 0.0
    %292 = vmatpush1.msra.mxu0 0.0
    %293 = vmatprep.subr.mxu0 0.0
    %294 = vmatpush1.msra.mxu0 0.0
    %295 = vmatprep.subr.mxu0 0.0
    %296 = vmatpush1.msra.mxu0 0.0
    %297 = vmatprep.subr.mxu0 0.0
    %298 = vmatpush1.msra.mxu0 0.0
    %299 = vmatprep.subr.mxu0 0.0
    %300 = vmatpush1.msra.mxu0 0.0
    %301 = vmatprep.subr.mxu0 0.0
    %302 = vmatpush1.msra.mxu0 0.0
    %303 = vmatprep.subr.mxu0 0.0
    %304 = vmatpush1.msra.mxu0 0.0
    %305 = vmatprep.subr.mxu0 0.0
    %306 = vmatpush1.msra.mxu0 0.0
    %307 = vmatprep.subr.mxu0 0.0
    %308 = vmatpush1.msra.mxu0 0.0
    %309 = vmatprep.subr.mxu0 0.0
    %310 = vmatpush1.msra.mxu0 0.0
    %311 = vmatprep.subr.mxu0 0.0
    %312 = vmatpush1.msra.mxu0 0.0
    %313 = vmatprep.subr.mxu0 0.0
    %314 = vmatpush1.msra.mxu0 0.0
    %315 = vmatprep.subr.mxu0 0.0
    %316 = vmatpush1.msra.mxu0 0.0
    %317 = vmatprep.subr.mxu0 0.0
    %318 = vmatpush1.msra.mxu0 0.0
    %319 = vmatprep.subr.mxu0 0.0
    %320 = vmatpush1.msra.mxu0 %v273
    %321 = vmatprep.subr.mxu0 0.0
    %322 = vmatpush2.msra.mxu0 0.0
    %323 = vmatprep.subr.mxu0 0.0
    %324 = vmatpush2.msra.mxu0 0.0
    %325 = vmatprep.subr.mxu0 0.0
    %326 = vmatpush2.msra.mxu0 0.0
    %327 = vmatprep.subr.mxu0 0.0
    %328 = vmatpush2.msra.mxu0 0.0
    %329 = vmatprep.subr.mxu0 0.0
    %330 = vmatpush2.msra.mxu0 0.0
    %331 = vmatprep.subr.mxu0 0.0
    %332 = vmatpush2.msra.mxu0 0.0
    %333 = vmatprep.subr.mxu0 0.0
    %334 = vmatpush2.msra.mxu0 0.0
    %335 = vmatprep.subr.mxu0 0.0
    %336 = vmatpush2.msra.mxu0 0.0
    %337 = vmatprep.subr.mxu0 0.0
    %338 = vmatpush2.msra.mxu0 0.0
    %339 = vmatprep.subr.mxu0 0.0
    %340 = vmatpush2.msra.mxu0 0.0
    %341 = vmatprep.subr.mxu0 0.0
    %342 = vmatpush2.msra.mxu0 0.0
    %343 = vmatprep.subr.mxu0 0.0
    %344 = vmatpush2.msra.mxu0 0.0
    %345 = vmatprep.subr.mxu0 0.0
    %346 = vmatpush2.msra.mxu0 0.0
    %347 = vmatprep.subr.mxu0 0.0
    %348 = vmatpush2.msra.mxu0 0.0
    %349 = vmatprep.subr.mxu0 0.0
    %350 = vmatpush2.msra.mxu0 0.0
    %351 = vmatprep.subr.mxu0 0.0
    %352 = vmatpush2.msra.mxu0 0.0
    %353 = vmatprep.mubr.f32.mxu0 0.0
    %354 = vmatmul.mubr.f32.gmra.mxu0 %v287
    %v355 = vpop.f32.mrf.mxu0
    %v356 = vadd.f32 0.0, %v355
    %v357 = vpop.f32.mrf.mxu0
    %358 = vdwg.mxu0
    %v360 = vsel %vm285, %v15, 0
    %362 = vmatprep.subr.mxu0 0.0
    %363 = vmatpush1.msra.mxu0 0.0
    %364 = vmatprep.subr.mxu0 0.0
    %365 = vmatpush1.msra.mxu0 0.0
    %366 = vmatprep.subr.mxu0 0.0
    %367 = vmatpush1.msra.mxu0 0.0
    %368 = vmatprep.subr.mxu0 0.0
    %369 = vmatpush1.msra.mxu0 0.0
    %370 = vmatprep.subr.mxu0 0.0
    %371 = vmatpush1.msra.mxu0 0.0
    %372 = vmatprep.subr.mxu0 0.0
    %373 = vmatpush1.msra.mxu0 0.0
    %374 = vmatprep.subr.mxu0 0.0
    %375 = vmatpush1.msra.mxu0 0.0
    %376 = vmatprep.subr.mxu0 0.0
    %377 = vmatpush1.msra.mxu0 0.0
    %378 = vmatprep.subr.mxu0 0.0
    %379 = vmatpush1.msra.mxu0 0.0
    %380 = vmatprep.subr.mxu0 0.0
    %381 = vmatpush1.msra.mxu0 0.0
    %382 = vmatprep.subr.mxu0 0.0
    %383 = vmatpush1.msra.mxu0 0.0
    %384 = vmatprep.subr.mxu0 0.0
    %385 = vmatpush1.msra.mxu0 0.0
    %386 = vmatprep.subr.mxu0 0.0
    %387 = vmatpush1.msra.mxu0 0.0
    %388 = vmatprep.subr.mxu0 0.0
    %389 = vmatpush1.msra.mxu0 0.0
    %390 = vmatprep.subr.mxu0 0.0
    %391 = vmatpush1.msra.mxu0 0.0
    %392 = vmatprep.subr.mxu0 0.0
    %393 = vmatpush1.msra.mxu0 %v284
    %394 = vmatprep.subr.mxu0 0.0
    %395 = vmatpush2.msra.mxu0 0.0
    %396 = vmatprep.subr.mxu0 0.0
    %397 = vmatpush2.msra.mxu0 0.0
    %398 = vmatprep.subr.mxu0 0.0
    %399 = vmatpush2.msra.mxu0 0.0
    %400 = vmatprep.subr.mxu0 0.0
    %401 = vmatpush2.msra.mxu0 0.0
    %402 = vmatprep.subr.mxu0 0.0
    %403 = vmatpush2.msra.mxu0 0.0
    %404 = vmatprep.subr.mxu0 0.0
    %405 = vmatpush2.msra.mxu0 0.0
    %406 = vmatprep.subr.mxu0 0.0
    %407 = vmatpush2.msra.mxu0 0.0
    %408 = vmatprep.subr.mxu0 0.0
    %409 = vmatpush2.msra.mxu0 0.0
    %410 = vmatprep.subr.mxu0 0.0
    %411 = vmatpush2.msra.mxu0 0.0
    %412 = vmatprep.subr.mxu0 0.0
    %413 = vmatpush2.msra.mxu0 0.0
    %414 = vmatprep.subr.mxu0 0.0
    %415 = vmatpush2.msra.mxu0 0.0
    %416 = vmatprep.subr.mxu0 0.0
    %417 = vmatpush2.msra.mxu0 0.0
    %418 = vmatprep.subr.mxu0 0.0
    %419 = vmatpush2.msra.mxu0 0.0
    %420 = vmatprep.subr.mxu0 0.0
    %421 = vmatpush2.msra.mxu0 0.0
    %422 = vmatprep.subr.mxu0 0.0
    %423 = vmatpush2.msra.mxu0 0.0
    %424 = vmatprep.subr.mxu0 0.0
    %425 = vmatpush2.msra.mxu0 0.0
    %426 = vmatprep.mubr.f32.mxu0 0.0
    %427 = vmatmul.mubr.f32.gmra.mxu0 %v360
    %v428 = vpop.f32.mrf.mxu0
    %v429 = vadd.f32 %v356, %v428
    %v430 = vpop.f32.mrf.mxu0
    %431 = vdwg.mxu0
    %v433 = vsel %vm81, %v17, 0
    %v436 = vsel %vm85, %v12, 0
    %438 = vmatprep.subr.mxu0 0.0
    %439 = vmatpush1.msra.mxu0 0.0
    %440 = vmatprep.subr.mxu0 0.0
    %441 = vmatpush1.msra.mxu0 0.0
    %442 = vmatprep.subr.mxu0 0.0
    %443 = vmatpush1.msra.mxu0 0.0
    %444 = vmatprep.subr.mxu0 0.0
    %445 = vmatpush1.msra.mxu0 0.0
    %446 = vmatprep.subr.mxu0 0.0
    %447 = vmatpush1.msra.mxu0 0.0
    %448 = vmatprep.subr.mxu0 0.0
    %449 = vmatpush1.msra.mxu0 0.0
    %450 = vmatprep.subr.mxu0 0.0
    %451 = vmatpush1.msra.mxu0 0.0
    %452 = vmatprep.subr.mxu0 0.0
    %453 = vmatpush1.msra.mxu0 0.0
    %454 = vmatprep.subr.mxu0 0.0
    %455 = vmatpush1.msra.mxu0 0.0
    %456 = vmatprep.subr.mxu0 0.0
    %457 = vmatpush1.msra.mxu0 0.0
    %458 = vmatprep.subr.mxu0 0.0
    %459 = vmatpush1.msra.mxu0 0.0
    %460 = vmatprep.subr.mxu0 0.0
    %461 = vmatpush1.msra.mxu0 0.0
    %462 = vmatprep.subr.mxu0 0.0
    %463 = vmatpush1.msra.mxu0 0.0
    %464 = vmatprep.subr.mxu0 0.0
    %465 = vmatpush1.msra.mxu0 0.0
    %466 = vmatprep.subr.mxu0 0.0
    %467 = vmatpush1.msra.mxu0 0.0
    %468 = vmatprep.subr.mxu0 0.0
    %469 = vmatpush1.msra.mxu0 %v436
    %470 = vmatprep.subr.mxu0 0.0
    %471 = vmatpush2.msra.mxu0 0.0
    %472 = vmatprep.subr.mxu0 0.0
    %473 = vmatpush2.msra.mxu0 0.0
    %474 = vmatprep.subr.mxu0 0.0
    %475 = vmatpush2.msra.mxu0 0.0
    %476 = vmatprep.subr.mxu0 0.0
    %477 = vmatpush2.msra.mxu0 0.0
    %478 = vmatprep.subr.mxu0 0.0
    %479 = vmatpush2.msra.mxu0 0.0
    %480 = vmatprep.subr.mxu0 0.0
    %481 = vmatpush2.msra.mxu0 0.0
    %482 = vmatprep.subr.mxu0 0.0
    %483 = vmatpush2.msra.mxu0 0.0
    %484 = vmatprep.subr.mxu0 0.0
    %485 = vmatpush2.msra.mxu0 0.0
    %486 = vmatprep.subr.mxu0 0.0
    %487 = vmatpush2.msra.mxu0 0.0
    %488 = vmatprep.subr.mxu0 0.0
    %489 = vmatpush2.msra.mxu0 0.0
    %490 = vmatprep.subr.mxu0 0.0
    %491 = vmatpush2.msra.mxu0 0.0
    %492 = vmatprep.subr.mxu0 0.0
    %493 = vmatpush2.msra.mxu0 0.0
    %494 = vmatprep.subr.mxu0 0.0
    %495 = vmatpush2.msra.mxu0 0.0
    %496 = vmatprep.subr.mxu0 0.0
    %497 = vmatpush2.msra.mxu0 0.0
    %498 = vmatprep.subr.mxu0 0.0
    %499 = vmatpush2.msra.mxu0 0.0
    %500 = vmatprep.subr.mxu0 0.0
    %501 = vmatpush2.msra.mxu0 0.0
    %502 = vmatprep.mubr.f32.mxu0 0.0
    %503 = vmatmul.mubr.f32.gmra.mxu0 %v433
    %v504 = vpop.f32.mrf.mxu0
    %v505 = vadd.f32 0.0, %v504
    %v506 = vpop.f32.mrf.mxu0
    %507 = vdwg.mxu0
    %v508 = vadd.f32 %v429, %v505
    %509 = vset.pattern.permute.xlu0 3
    %510 = vperm.xlu0 %509, %v18
    %v511 = vpop.permute.xlu0 %510
    %v513 = vadd.f32 %v508, %v511
    %514 = vst.msk [vmem:[#allocation2] sm:$0xff] %vm241, %v513
    // Predicated region
    $region10: #{tpu_custom_call.1} parent=1 // pred_check
      _
    $region11: #{tpu_custom_call.1} parent=1 // pred_check_branch
      %516 = sbr.rel (0) target = $region13
    $region12: #{tpu_custom_call.1} parent=1 // pred_region
      %s518 = ssub.s32 128, 128
      %519 = vsyncadd [#allocation3], %s518
      %s521 = sshll.u32 [#allocation2], 4
      %s522 = int_to_ptr.vmem [resolvable:$true] %s521
      %524 = dma.vmem_to_hbm [thread:$0]  %s522, 128, %s2, [#allocation3]
    $region13: #{tpu_custom_call.1} parent=1 // pred_fallthru
      _
    // Predicated region
    $region14: #{tpu_custom_call.1} parent=1 // pred_check
      _
    $region15: #{tpu_custom_call.1} parent=1 // pred_check_branch
      %526 = sbr.rel (0) target = $region17
    $region16: #{tpu_custom_call.1} parent=1 // pred_region
      %527 = dma.done [#allocation3], 128
    $region17: #{tpu_custom_call.1} parent=1 // pred_fallthru
      _
    %528 = vsyncpa [#allocation3], 1

</llo_original>
